<compile_context>
chip_gen: v5e
topology: v5e:2x2
jax: 0.10.0
libtpu: 0.0.40
codegen_flags: <defaults>
</compile_context>

<pallas_src>
import functools

import jax
import jax.numpy as jnp
from jax import lax
from jax.experimental import pallas as pl
from jax.experimental.pallas import tpu as pltpu

BN_EPS = 1e-5
VMEM_LIMIT_BYTES = 32 * 1024 * 1024   # <= v7x default scoped VMEM


def _round_up(x, m):
  return ((x + m - 1) // m) * m


# ----------------------------- Pallas kernels --------------------------------
def _stats_kernel(p_ref, w1_ref, stats_ref):
  """Pass 1: per-channel sum / sum-of-squares of the fused 3x3-conv output.

  p_ref    : (TILE_M, K)  bf16 im2col patches tile
  w1_ref   : (K, C1)      bf16 fused conv weights (C1 = 64 * n_heads)
  stats_ref: (2, C1)      f32 accumulator (row 0 = sum, row 1 = sumsq);
                          same block every grid step -> VMEM-resident.
  """
  @pl.when(pl.program_id(0) == 0)
  def _():
    stats_ref[...] = jnp.zeros_like(stats_ref)

  y = jnp.dot(p_ref[...], w1_ref[...], preferred_element_type=jnp.float32)
  s = jnp.sum(y, axis=0, keepdims=True)
  ss = jnp.sum(y * y, axis=0, keepdims=True)
  stats_ref[...] += jnp.concatenate([s, ss], axis=0)


def _apply_kernel(p_ref, w1_ref, scale_ref, shift_ref, w2t_ref, b2_ref, o_ref):
  """Pass 2: conv matmul + folded BN (scale/shift) + ReLU + block-diag 1x1 conv.

  p_ref    : (TILE_M, K)       bf16 im2col patches tile
  w1_ref   : (K, C1)           bf16 fused conv weights
  scale_ref: (1, C1)           f32 gamma * rsqrt(var + eps)
  shift_ref: (1, C1)           f32 beta - mean * scale
  w2t_ref  : (C_total, C1)     bf16 block-diagonal 1x1 weights, transposed
  b2_ref   : (C_total, 1)      f32 1x1 biases
  o_ref    : (C_total, TILE_M) f32 transposed output tile (lane-dense store)
  """
  y = jnp.dot(p_ref[...], w1_ref[...], preferred_element_type=jnp.float32)
  y = y * scale_ref[...] + shift_ref[...]            # folded BatchNorm
  y = jnp.maximum(y, 0.0)                            # ReLU
  # Transposed 1x1 conv: (C_total, C1) x (TILE_M, C1) contracted on C1
  # -> (C_total, TILE_M); output lanes are the M dimension (lane dense).
  out = lax.dot_general(w2t_ref[...], y.astype(w2t_ref.dtype),
                        (((1,), (1,)), ((), ())),
                        preferred_element_type=jnp.float32)
  o_ref[...] = out + b2_ref[...]


# ------------------------------- JAX glue -------------------------------------
def _im2col_3x3(x_nhwc):
  """(N,H,W,C) -> (N*H*W, 9*C), padding=1, tap order (kh, kw, cin)."""
  n, h, w, c = x_nhwc.shape
  xp = jnp.pad(x_nhwc, ((0, 0), (1, 1), (1, 1), (0, 0)))
  cols = []
  for kh in range(3):
    for kw in range(3):
      cols.append(xp[:, kh:kh + h, kw:kw + w, :])
  patches = jnp.stack(cols, axis=-2)          # (N, H, W, 9, C)
  return patches.reshape(n * h * w, 9 * c)


def _build_fused_params(params, heads_items, head_conv):
  """Concatenate per-head weights into one fused head."""
  k = 9 * head_conv
  n_heads = len(heads_items)
  c1 = 64 * n_heads
  c_total = sum(c for _, c in heads_items)
  w1_list, g_list, bt_list, b2_list = [], [], [], []
  w2t = jnp.zeros((c_total, c1), jnp.float32)
  c_off = 0
  for h_idx, (name, classes) in enumerate(heads_items):
    p = params[name]
    w1_list.append(p['w1'].reshape(k, 64))
    g_list.append(p['gamma'])
    bt_list.append(p['beta'])
    b2_list.append(p['b2'])
    # block-diagonal 1x1 conv, stored transposed: (C_total, C1)
    w2t = w2t.at[c_off:c_off + classes, 64 * h_idx:64 * (h_idx + 1)].set(
        p['w2'].T)
    c_off += classes
  w1_cat = jnp.concatenate(w1_list, axis=1)      # (K, C1)
  gamma = jnp.concatenate(g_list)                # (C1,)
  beta = jnp.concatenate(bt_list)                # (C1,)
  b2 = jnp.concatenate(b2_list)                  # (C_total,)
  return w1_cat, gamma, beta, w2t, b2


def init_yolox_head_params(heads, head_conv, key):
  """Deterministic synthetic parameters matching the module's shapes."""
  params = {}
  for head, classes in heads:
    key, k1, k2, k3, _ = jax.random.split(key, 5)
    fan_in1 = head_conv * 9
    bound1 = 1.0 / jnp.sqrt(fan_in1)
    # Conv2d(head_conv, 64, 3x3) weight stored HWIO: (3, 3, Cin, 64).
    w1 = jax.random.uniform(k1, (3, 3, head_conv, 64), jnp.float32,
                            -bound1, bound1)
    # b1 is kept for module fidelity but is cancelled by batch-mean subtraction
    # (unused by the fused kernel path).
    b1 = jax.random.uniform(k2, (64,), jnp.float32, -bound1, bound1)
    gamma = jnp.ones((64,), jnp.float32)
    beta = jnp.zeros((64,), jnp.float32)
    bound2 = 1.0 / jnp.sqrt(64.0)
    w2 = jax.random.uniform(k3, (64, classes), jnp.float32, -bound2, bound2)
    if 'hm' in head and head != 'hm_hp_offset':
      b2 = jnp.full((classes,), -2.19, jnp.float32)
    else:
      b2 = jnp.zeros((classes,), jnp.float32)
    params[head] = dict(w1=w1, b1=b1, gamma=gamma, beta=beta, w2=w2, b2=b2)
  return params


@functools.partial(jax.jit, static_argnames=('heads_items', 'tile_m'))
def yolox_head_forward(x_nchw, params, heads_items, tile_m=512):
  """x_nchw: (N, head_conv, H, W) -> dict of (N, classes, H, W)."""
  n, cin, h, w = x_nchw.shape
  m = n * h * w
  k = 9 * cin
  n_heads = len(heads_items)
  c1 = 64 * n_heads
  c_total = sum(c for _, c in heads_items)

  # Lane-dense tiles: TILE_M must be a multiple of 128 (output lane dim).
  tile_m = max(128, (int(tile_m) // 128) * 128)
  m_pad = _round_up(m, tile_m)
  mt = m_pad // tile_m

  x_nhwc = jnp.transpose(x_nchw, (0, 2, 3, 1)).astype(jnp.float32)
  patches = _im2col_3x3(x_nhwc).astype(jnp.bfloat16)        # (M, K) bf16
  if m_pad != m:
    patches = jnp.pad(patches, ((0, m_pad - m), (0, 0)))    # zero rows: no
                                                            # effect on stats

  w1_cat, gamma, beta, w2t, b2 = _build_fused_params(params, heads_items, cin)
  w1_bf = w1_cat.astype(jnp.bfloat16)
  w2t_bf = w2t.astype(jnp.bfloat16)

  # ---- pass 1: global per-channel sum / sumsq of the conv output ----
  stats = pl.pallas_call(
      _stats_kernel,
      out_shape=jax.ShapeDtypeStruct((2, c1), jnp.float32),
      grid_spec=pltpu.PrefetchScalarGridSpec(
          num_scalar_prefetch=0,
          grid=(mt,),
          in_specs=[
              pl.BlockSpec((tile_m, k), lambda i: (i, 0)),
              pl.BlockSpec((k, c1), lambda i: (0, 0)),
          ],
          out_specs=pl.BlockSpec((2, c1), lambda i: (0, 0)),
      ),
      compiler_params=pltpu.CompilerParams(
          dimension_semantics=("arbitrary",),
          vmem_limit_bytes=VMEM_LIMIT_BYTES),
      cost_estimate=pl.CostEstimate(
          flops=2 * m_pad * k * c1 + 3 * m_pad * c1,
          transcendentals=0,
          bytes_accessed=m_pad * k * 2 + k * c1 * 2 + 2 * c1 * 4),
  )(patches, w1_bf)

  # Fold BN (training-mode batch statistics, biased variance) into scale/shift.
  cnt = jnp.float32(m)
  mean = stats[0] / cnt
  var = jnp.maximum(stats[1] / cnt - mean * mean, 0.0)
  scale_vec = gamma * lax.rsqrt(var + BN_EPS)
  shift_vec = beta - mean * scale_vec
  scale = scale_vec.reshape(1, c1)
  shift = shift_vec.reshape(1, c1)
  b2_col = b2.reshape(c_total, 1)

  # ---- pass 2: conv + BN + ReLU + block-diag 1x1 conv, transposed output ----
  out_t = pl.pallas_call(
      _apply_kernel,
      out_shape=jax.ShapeDtypeStruct((c_total, m_pad), jnp.float32),
      grid_spec=pltpu.PrefetchScalarGridSpec(
          num_scalar_prefetch=0,
          grid=(mt,),
          in_specs=[
              pl.BlockSpec((tile_m, k), lambda i: (i, 0)),
              pl.BlockSpec((k, c1), lambda i: (0, 0)),
              pl.BlockSpec((1, c1), lambda i: (0, 0)),
              pl.BlockSpec((1, c1), lambda i: (0, 0)),
              pl.BlockSpec((c_total, c1), lambda i: (0, 0)),
              pl.BlockSpec((c_total, 1), lambda i: (0, 0)),
          ],
          out_specs=pl.BlockSpec((c_total, tile_m), lambda i: (0, i)),
      ),
      compiler_params=pltpu.CompilerParams(
          dimension_semantics=("parallel",),     # 2 TCs on v7x
          vmem_limit_bytes=VMEM_LIMIT_BYTES),
      cost_estimate=pl.CostEstimate(
          flops=2 * m_pad * k * c1 + 2 * m_pad * c1 * c_total + 3 * m_pad * c1,
          transcendentals=0,
          bytes_accessed=(m_pad * k * 2 + k * c1 * 2 + 2 * c1 * 4
                          + c_total * c1 * 2 + c_total * 4
                          + c_total * m_pad * 4)),
  )(patches, w1_bf, scale, shift, w2t_bf, b2_col)

  out_t = out_t[:, :m]                                     # drop row padding

  # Split fused output back into per-head NCHW tensors (tiny XLA ops).
  out = {}
  c_off = 0
  for name, classes in heads_items:
    y = out_t[c_off:c_off + classes].reshape(classes, n, h, w)
    out[name] = jnp.transpose(y, (1, 0, 2, 3))             # (N, classes, H, W)
    c_off += classes
  return out


# Pure-JAX reference with the SAME precision policy (bf16 MXU operands,
# f32 accumulation / BN), used for a tight correctness check.
@functools.partial(jax.jit, static_argnames=('heads_items',))
def yolox_head_reference(x_nchw, params, heads_items):
  x_nhwc = jnp.transpose(x_nchw, (0, 2, 3, 1)).astype(jnp.float32)
  x_bf = x_nhwc.astype(jnp.bfloat16)
  out = {}
  for name, _ in heads_items:
    p = params[name]
    y = lax.conv_general_dilated(
        x_bf, p['w1'].astype(jnp.bfloat16), window_strides=(1, 1),
        padding='SAME', dimension_numbers=('NHWC', 'HWIO', 'NHWC'),
        preferred_element_type=jnp.float32) + p['b1']
    mean = jnp.mean(y, axis=(0, 1, 2), keepdims=True)
    var = jnp.mean(jnp.square(y - mean), axis=(0, 1, 2), keepdims=True)
    y = (y - mean) * lax.rsqrt(var + BN_EPS)
    y = y * p['gamma'] + p['beta']
    y = jnp.maximum(y, 0.0)
    y = jnp.einsum('nhwc,ck->nhwk', y.astype(jnp.bfloat16),
                   p['w2'].astype(jnp.bfloat16),
                   preferred_element_type=jnp.float32) + p['b2']
    out[name] = jnp.transpose(y, (0, 3, 1, 2))
  return out


if __name__ == "__main__":
  heads_items = (('hm', 2), ('wh', 2), ('reg', 2))
  head_conv = 4
  N, H, W = 2, 16, 16

  key = jax.random.PRNGKey(0)
  key, kx = jax.random.split(key)
  x = jax.random.normal(kx, (N, head_conv, H, W), jnp.float32)  # NCHW input

  params = init_yolox_head_params(heads_items, head_conv, key)

  # tile_m=128 -> 4 grid steps, exercising the tiled two-pass BN path.
  out = yolox_head_forward(x, params, heads_items, tile_m=128)
  out = jax.block_until_ready(out)

  ref = yolox_head_reference(x, params, heads_items)
  ref = jax.block_until_ready(ref)

  for name, classes in heads_items:
    assert out[name].shape == (N, classes, H, W), out[name].shape
    max_err = float(jnp.max(jnp.abs(out[name] - ref[name])))
    # bf16 MXU operands in both paths; residual difference is summation-order
    # level plus rare bf16 rounding flips of intermediates -> well under 5e-3.
    assert max_err < 5e-3, f"{name}: max abs err {max_err}"

  print("KERNEL_OK")
</pallas_src>

<mosaic_0001>
module attributes {stable_mosaic.version = 11 : i64} {
  func.func @_stats_kernel(%arg0: i32, %arg1: memref<128x36xbf16, #tpu.memory_space<vmem>>, %arg2: memref<36x192xbf16, #tpu.memory_space<vmem>>, %arg3: memref<2x192xf32, #tpu.memory_space<vmem>>) attributes {dimension_semantics = [#tpu.dimension_semantics<arbitrary>], iteration_bounds = array<i64: 4>, scalar_prefetch = 0 : i64, scratch_operands = 0 : i64, tpu.core_type = #tpu.core_type<tc>, window_params = [{transform_indices = @transform_0, window_bounds = array<i64: 128, 36>}, {pipeline_mode = #tpu.pipeline_mode<synchronous>, transform_indices = @transform_1, window_bounds = array<i64: 36, 192>}, {pipeline_mode = #tpu.pipeline_mode<synchronous>, transform_indices = @transform_2, window_bounds = array<i64: 2, 192>}]} {
    %c0_i32 = arith.constant 0 : i32
    %0 = arith.cmpi eq, %arg0, %c0_i32 : i32
    %1 = arith.extui %0 : i1 to i32
    %c0_i32_0 = arith.constant 0 : i32
    %2 = arith.cmpi ne, %1, %c0_i32_0 : i32
    scf.if %2 {
      %cst_10 = arith.constant 0.000000e+00 : f32
      %15 = vector.broadcast %cst_10 : f32 to vector<2x192xf32>
      %c0_11 = arith.constant 0 : index
      %c0_12 = arith.constant 0 : index
      %16 = vector.load %arg3[%c0_11, %c0_12] : memref<2x192xf32, #tpu.memory_space<vmem>>, vector<2x192xf32>
      tpu.vector_store %arg3[%c0_11, %c0_12], %15 {strides = array<i32>} : memref<2x192xf32, #tpu.memory_space<vmem>>, vector<2x192xf32>,
    } else {
    }
    %c0 = arith.constant 0 : index
    %c0_1 = arith.constant 0 : index
    %3 = vector.load %arg1[%c0, %c0_1] : memref<128x36xbf16, #tpu.memory_space<vmem>>, vector<128x36xbf16>
    %c0_2 = arith.constant 0 : index
    %c0_3 = arith.constant 0 : index
    %4 = vector.load %arg2[%c0_2, %c0_3] : memref<36x192xbf16, #tpu.memory_space<vmem>>, vector<36x192xbf16>
    %cst = arith.constant dense<0.000000e+00> : vector<128x192xf32>
    %5 = tpu.matmul %3, %4, %cst {dimension_numbers = #tpu.dot_dimension_numbers<[1], [0], [0], [1], [0, 0, 1, 1], [], []>} : vector<128x36xbf16>, vector<36x192xbf16>, vector<128x192xf32> -> vector<128x192xf32>
    %cst_4 = arith.constant dense<0.000000e+00> : vector<192xf32>
    %6 = vector.multi_reduction <add>, %5, %cst_4 [0] : vector<128x192xf32> to vector<192xf32>
    %7 = vector.shape_cast %6 : vector<192xf32> to vector<1x192xf32>
    %8 = arith.mulf %5, %5 : vector<128x192xf32>
    %cst_5 = arith.constant dense<0.000000e+00> : vector<192xf32>
    %9 = vector.multi_reduction <add>, %8, %cst_5 [0] : vector<128x192xf32> to vector<192xf32>
    %10 = vector.shape_cast %9 : vector<192xf32> to vector<1x192xf32>
    %c0_6 = arith.constant 0 : index
    %c0_7 = arith.constant 0 : index
    %11 = vector.load %arg3[%c0_6, %c0_7] : memref<2x192xf32, #tpu.memory_space<vmem>>, vector<2x192xf32>
    %12 = tpu.concatenate %7, %10 in 0 : vector<1x192xf32>, vector<1x192xf32> -> vector<2x192xf32>
    %13 = arith.addf %11, %12 : vector<2x192xf32>
    %c0_8 = arith.constant 0 : index
    %c0_9 = arith.constant 0 : index
    %14 = vector.load %arg3[%c0_8, %c0_9] : memref<2x192xf32, #tpu.memory_space<vmem>>, vector<2x192xf32>
    tpu.vector_store %arg3[%c0_8, %c0_9], %13 {strides = array<i32>} : memref<2x192xf32, #tpu.memory_space<vmem>>, vector<2x192xf32>,
    return
  }
  func.func @transform_0(%arg0: i32) -> (i32, i32) {
    %c0_i32 = arith.constant 0 : i32
    %c0_i32_0 = arith.constant 0 : i32
    return %arg0, %c0_i32 : i32, i32
  }
  func.func @transform_1(%arg0: i32) -> (i32, i32) {
    %c0_i32 = arith.constant 0 : i32
    %c0_i32_0 = arith.constant 0 : i32
    %c0_i32_1 = arith.constant 0 : i32
    return %c0_i32, %c0_i32_0 : i32, i32
  }
  func.func @transform_2(%arg0: i32) -> (i32, i32) {
    %c0_i32 = arith.constant 0 : i32
    %c0_i32_0 = arith.constant 0 : i32
    %c0_i32_1 = arith.constant 0 : i32
    return %c0_i32, %c0_i32_0 : i32, i32
  }
}

module attributes {stable_mosaic.version = 11 : i64} {
  func.func @_apply_kernel(%arg0: i32, %arg1: memref<128x36xbf16, #tpu.memory_space<vmem>>, %arg2: memref<36x192xbf16, #tpu.memory_space<vmem>>, %arg3: memref<1x192xf32, #tpu.memory_space<vmem>>, %arg4: memref<1x192xf32, #tpu.memory_space<vmem>>, %arg5: memref<6x192xbf16, #tpu.memory_space<vmem>>, %arg6: memref<6x1xf32, #tpu.memory_space<vmem>>, %arg7: memref<6x128xf32, #tpu.memory_space<vmem>>) attributes {dimension_semantics = [#tpu.dimension_semantics<parallel>], iteration_bounds = array<i64: 4>, scalar_prefetch = 0 : i64, scratch_operands = 0 : i64, tpu.core_type = #tpu.core_type<tc>, window_params = [{transform_indices = @transform_0, window_bounds = array<i64: 128, 36>}, {pipeline_mode = #tpu.pipeline_mode<synchronous>, transform_indices = @transform_1, window_bounds = array<i64: 36, 192>}, {pipeline_mode = #tpu.pipeline_mode<synchronous>, transform_indices = @transform_2, window_bounds = array<i64: 1, 192>}, {pipeline_mode = #tpu.pipeline_mode<synchronous>, transform_indices = @transform_3, window_bounds = array<i64: 1, 192>}, {pipeline_mode = #tpu.pipeline_mode<synchronous>, transform_indices = @transform_4, window_bounds = array<i64: 6, 192>}, {pipeline_mode = #tpu.pipeline_mode<synchronous>, transform_indices = @transform_5, window_bounds = array<i64: 6, 1>}, {transform_indices = @transform_6, window_bounds = array<i64: 6, 128>}]} {
    %c0 = arith.constant 0 : index
    %c0_0 = arith.constant 0 : index
    %0 = vector.load %arg1[%c0, %c0_0] : memref<128x36xbf16, #tpu.memory_space<vmem>>, vector<128x36xbf16>
    %c0_1 = arith.constant 0 : index
    %c0_2 = arith.constant 0 : index
    %1 = vector.load %arg2[%c0_1, %c0_2] : memref<36x192xbf16, #tpu.memory_space<vmem>>, vector<36x192xbf16>
    %cst = arith.constant dense<0.000000e+00> : vector<128x192xf32>
    %2 = tpu.matmul %0, %1, %cst {dimension_numbers = #tpu.dot_dimension_numbers<[1], [0], [0], [1], [0, 0, 1, 1], [], []>} : vector<128x36xbf16>, vector<36x192xbf16>, vector<128x192xf32> -> vector<128x192xf32>
    %c0_3 = arith.constant 0 : index
    %c0_4 = arith.constant 0 : index
    %3 = vector.load %arg3[%c0_3, %c0_4] : memref<1x192xf32, #tpu.memory_space<vmem>>, vector<1x192xf32>
    %4 = vector.broadcast %3 : vector<1x192xf32> to vector<128x192xf32>
    %5 = arith.mulf %2, %4 : vector<128x192xf32>
    %c0_5 = arith.constant 0 : index
    %c0_6 = arith.constant 0 : index
    %6 = vector.load %arg4[%c0_5, %c0_6] : memref<1x192xf32, #tpu.memory_space<vmem>>, vector<1x192xf32>
    %7 = vector.broadcast %6 : vector<1x192xf32> to vector<128x192xf32>
    %8 = arith.addf %5, %7 : vector<128x192xf32>
    %cst_7 = arith.constant 0.000000e+00 : f32
    %9 = vector.broadcast %cst_7 : f32 to vector<128x192xf32>
    %10 = arith.maximumf %8, %9 : vector<128x192xf32>
    %c0_8 = arith.constant 0 : index
    %c0_9 = arith.constant 0 : index
    %11 = vector.load %arg5[%c0_8, %c0_9] : memref<6x192xbf16, #tpu.memory_space<vmem>>, vector<6x192xbf16>
    %12 = arith.truncf %10 : vector<128x192xf32> to vector<128x192xbf16>
    %cst_10 = arith.constant dense<0.000000e+00> : vector<6x128xf32>
    %13 = tpu.matmul %11, %12, %cst_10 {dimension_numbers = #tpu.dot_dimension_numbers<[1], [1], [0], [0], [0, 0, 1, 0], [], []>} : vector<6x192xbf16>, vector<128x192xbf16>, vector<6x128xf32> -> vector<6x128xf32>
    %c0_11 = arith.constant 0 : index
    %c0_12 = arith.constant 0 : index
    %14 = vector.load %arg6[%c0_11, %c0_12] : memref<6x1xf32, #tpu.memory_space<vmem>>, vector<6x1xf32>
    %15 = vector.broadcast %14 : vector<6x1xf32> to vector<6x128xf32>
    %16 = arith.addf %13, %15 : vector<6x128xf32>
    %c0_13 = arith.constant 0 : index
    %c0_14 = arith.constant 0 : index
    %17 = vector.load %arg7[%c0_13, %c0_14] : memref<6x128xf32, #tpu.memory_space<vmem>>, vector<6x128xf32>
    tpu.vector_store %arg7[%c0_13, %c0_14], %16 {strides = array<i32>} : memref<6x128xf32, #tpu.memory_space<vmem>>, vector<6x128xf32>,
    return
  }
  func.func @transform_0(%arg0: i32) -> (i32, i32) {
    %c0_i32 = arith.constant 0 : i32
    %c0_i32_0 = arith.constant 0 : i32
    return %arg0, %c0_i32 : i32, i32
  }
  func.func @transform_1(%arg0: i32) -> (i32, i32) {
    %c0_i32 = arith.constant 0 : i32
    %c0_i32_0 = arith.constant 0 : i32
    %c0_i32_1 = arith.constant 0 : i32
    return %c0_i32, %c0_i32_0 : i32, i32
  }
  func.func @transform_2(%arg0: i32) -> (i32, i32) {
    %c0_i32 = arith.constant 0 : i32
    %c0_i32_0 = arith.constant 0 : i32
    %c0_i32_1 = arith.constant 0 : i32
    return %c0_i32, %c0_i32_0 : i32, i32
  }
  func.func @transform_3(%arg0: i32) -> (i32, i32) {
    %c0_i32 = arith.constant 0 : i32
    %c0_i32_0 = arith.constant 0 : i32
    %c0_i32_1 = arith.constant 0 : i32
    return %c0_i32, %c0_i32_0 : i32, i32
  }
  func.func @transform_4(%arg0: i32) -> (i32, i32) {
    %c0_i32 = arith.constant 0 : i32
    %c0_i32_0 = arith.constant 0 : i32
    %c0_i32_1 = arith.constant 0 : i32
    return %c0_i32, %c0_i32_0 : i32, i32
  }
  func.func @transform_5(%arg0: i32) -> (i32, i32) {
    %c0_i32 = arith.constant 0 : i32
    %c0_i32_0 = arith.constant 0 : i32
    %c0_i32_1 = arith.constant 0 : i32
    return %c0_i32, %c0_i32_0 : i32, i32
  }
  func.func @transform_6(%arg0: i32) -> (i32, i32) {
    %c0_i32 = arith.constant 0 : i32
    %c0_i32_0 = arith.constant 0 : i32
    return %c0_i32, %arg0 : i32, i32
  }
}

</mosaic_0001>

<llo_original>
// kernel: yolox_head_forward.2
$region0: #{yolox_head_forward.2}
  #allocation0 [shape = 'u32[]', space=smem, size = 0x4, offset = 0x4, fixed_abs, tag = 'smem constant byte address 0x4 - core index']
  #allocation1 [shape = 'u32[72,128]{1,0:T(1,128)}', space=vmem, size = 0x9000, scoped, tag = 'internal scratch']
  %s0 = inlined_call_operand.vmem [shape: bf16[512,36], index: 0, kind: input, shape index: {}]
  %s1 = inlined_call_operand.vmem [shape: bf16[36,192], index: 1, kind: input, shape index: {}]
  %s2 = inlined_call_operand.vmem [shape: f32[2,192], index: 2, kind: output, shape index: {}]
  %s3 = sld [smem:[#allocation0]]
  $region45: #{yolox_head_forward.2} parent=0
    _
  %s5 = ssub.s32 1, %s3
  %s6 = scalar_select 0, %s5, %s3
  loop: start=0, step=1, limit=6
  $region2: #{yolox_head_forward.2} parent=0 // loop_pre_header
    _
  $region3: #{yolox_head_forward.2} parent=0 // loop_header
    %s8 = sphi 0, %s12
    %p9 = scmp.ge.s32.totalorder %s8, 6
    %s18 = sphi 0, %s20
    %s21 = sphi 0, %s18
    %s22 = sphi 0, %s21
    %s38 = sphi 0, %s22
    %s42 = sphi 0, %s42
    %s44 = sphi 0, %s42
    %s45 = sphi 0, %s44
    %s59 = sphi 0, %s45
    %s63 = sphi 0, %s63
    %s65 = sphi 0, %s63
    %s66 = sphi 0, %s65
    %s80 = sphi 0, %s66
  $region4: #{yolox_head_forward.2} parent=0 // loop_header_branch
    %11 = sbr.rel (%p9) target = $region8
  $region5: #{yolox_head_forward.2} parent=0 // loop_body
    %s13 = ssub.s32 %s8, 1
    %s14 = ssub.s32 %s8, 2
    %s15 = sadd.s32 %s8, 1
    %s16 = ssub.s32 %s8, %s15
    %p17 = scmp.eq.s32.totalorder %s16, 0
    %s19 = sadd.s32 %s18, 1
    %s20 = scalar_select %p17, %s18, %s19
    %p23 = pneg %p17
    %p24 = scmp.eq.s32.totalorder %s8, 3
    %p25 = por %p23, %p24
    %p26 = scmp.ne.s32.totalorder %s18, %s21
    %p27 = scmp.eq.s32.totalorder %s8, 0
    %p28 = por %p26, %p27
    %p29 = scmp.ne.s32.totalorder %s18, %s21
    %p30 = scmp.eq.s32.totalorder %s13, 3
    %p31 = por %p29, %p30
    %p32 = scmp.ne.s32.totalorder %s21, %s22
    %p33 = scmp.eq.s32.totalorder %s13, 0
    %p34 = por %p32, %p33
    %p35 = scmp.ne.s32.totalorder %s21, %s22
    %p36 = scmp.eq.s32.totalorder %s14, 3
    %p37 = por %p35, %p36
    %p39 = scmp.ne.s32.totalorder %s22, %s38
    %p40 = scmp.eq.s32.totalorder %s14, 0
    %p41 = por %p39, %p40
    %s43 = sadd.s32 %s42, 1
    %p46 = scmp.eq.s32.totalorder %s8, 3
    %p47 = scmp.ne.s32.totalorder %s42, %s44
    %p48 = scmp.eq.s32.totalorder %s8, 0
    %p49 = por %p47, %p48
    %p50 = scmp.ne.s32.totalorder %s42, %s44
    %p51 = scmp.eq.s32.totalorder %s13, 3
    %p52 = por %p50, %p51
    %p53 = scmp.ne.s32.totalorder %s44, %s45
    %p54 = scmp.eq.s32.totalorder %s13, 0
    %p55 = por %p53, %p54
    %p56 = scmp.ne.s32.totalorder %s44, %s45
    %p57 = scmp.eq.s32.totalorder %s14, 3
    %p58 = por %p56, %p57
    %p60 = scmp.ne.s32.totalorder %s45, %s59
    %p61 = scmp.eq.s32.totalorder %s14, 0
    %p62 = por %p60, %p61
    %s64 = sadd.s32 %s63, 1
    %p67 = scmp.eq.s32.totalorder %s8, 3
    %p68 = scmp.ne.s32.totalorder %s63, %s65
    %p69 = scmp.eq.s32.totalorder %s8, 0
    %p70 = por %p68, %p69
    %p71 = scmp.ne.s32.totalorder %s63, %s65
    %p72 = scmp.eq.s32.totalorder %s13, 3
    %p73 = por %p71, %p72
    %p74 = scmp.ne.s32.totalorder %s65, %s66
    %p75 = scmp.eq.s32.totalorder %s13, 0
    %p76 = por %p74, %p75
    %p77 = scmp.ne.s32.totalorder %s65, %s66
    %p78 = scmp.eq.s32.totalorder %s14, 3
    %p79 = por %p77, %p78
    %p81 = scmp.ne.s32.totalorder %s66, %s80
    %p82 = scmp.eq.s32.totalorder %s14, 0
    %p83 = por %p81, %p82
    %p84 = scmp.le.s32.totalorder 1, %s8
    %p85 = scmp.lt.s32.totalorder %s8, 5
    %p86 = pnand %p84, %p85
    %p87 = pneg %p86
    // Predicated region
    $region9: #{yolox_head_forward.2} parent=5 // pred_check
      _
    $region10: #{yolox_head_forward.2} parent=5 // pred_check_branch
      %89 = sbr.rel (%p86) target = $region12
    $region11: #{yolox_head_forward.2} parent=5 // pred_region
      %s90 = ssub.s32 %s8, 1
      // Predicated region
      $region13: #{yolox_head_forward.2} parent=11 // pred_check
        %p91 = pneg %p55
      $region14: #{yolox_head_forward.2} parent=11 // pred_check_branch
        %93 = sbr.rel (%p91) target = $region16
      $region15: #{yolox_head_forward.2} parent=11 // pred_region
        _
      $region16: #{yolox_head_forward.2} parent=11 // pred_fallthru
        _
    $region12: #{yolox_head_forward.2} parent=5 // pred_fallthru
      _
    %p94 = scmp.lt.s32.totalorder %s8, 4
    // Predicated region
    $region17: #{yolox_head_forward.2} parent=5 // pred_check
      %p95 = pneg %p94
    $region18: #{yolox_head_forward.2} parent=5 // pred_check_branch
      %97 = sbr.rel (%p95) target = $region20
    $region19: #{yolox_head_forward.2} parent=5 // pred_region
      // Predicated region
      $region21: #{yolox_head_forward.2} parent=19 // pred_check
        %p98 = pneg %p28
      $region22: #{yolox_head_forward.2} parent=19 // pred_check_branch
        %100 = sbr.rel (%p98) target = $region24
      $region23: #{yolox_head_forward.2} parent=19 // pred_region
        %s101 = smul.u32 16, %s8
        %p102 = scmp.lt.s32.totalorder %s101, 63
        %s103 = scalar_select %p102, %s101, 63
        %s104 = smul.addr %s103, 4
        %s105 = scalar_lea.vmem %s0, %s104
        %s106 = smul.u32 16, %s8
      $region24: #{yolox_head_forward.2} parent=19 // pred_fallthru
        _
    $region20: #{yolox_head_forward.2} parent=5 // pred_fallthru
      _
    %p107 = scmp.le.s32.totalorder 1, %s8
    %p108 = scmp.lt.s32.totalorder %s8, 5
    %p109 = pnand %p107, %p108
    %p110 = pneg %p109
    // Predicated region
    $region25: #{yolox_head_forward.2} parent=5 // pred_check
      _
    $region26: #{yolox_head_forward.2} parent=5 // pred_check_branch
      %112 = sbr.rel (%p109) target = $region28
    $region27: #{yolox_head_forward.2} parent=5 // pred_region
      %s113 = ssub.s32 %s8, 1
      %s114 = smul.u32 16, %s13
      %p115 = scmp.lt.s32.totalorder %s114, 63
      %s116 = scalar_select %p115, %s114, 63
      %s117 = smul.addr %s116, 4
      %s118 = scalar_lea.vmem %s0, %s117
      %p119 = pneg %p34
      %p120 = pneg %p31
      %p121 = pneg %p55
      %p122 = pneg %p52
      %p123 = pneg %p76
      %p124 = pneg %p73
      %s125 = smul.u32 16, %s13
      %p126 = scmp.lt.s32.totalorder %s125, 63
      %s127 = scalar_select %p126, %s125, 63
      %s128 = smul.addr %s127, 4
      %s129 = scalar_lea.vmem %s0, %s128
      %s130 = smul.u32 16, %s13
      %p132 = scmp.eq.s32.totalorder %s13, 0
      // Predicated region
      $region29: #{yolox_head_forward.2} parent=27 // pred_check
        %p133 = pneg %p132
      $region30: #{yolox_head_forward.2} parent=27 // pred_check_branch
        %135 = sbr.rel (%p133) target = $region32
      $region31: #{yolox_head_forward.2} parent=27 // pred_region
        %vm136 = vcmask 1041408
        %vm137 = vcmask 519170
        %vm138 = vmor %vm137, %vm136
        %139 = vst.msk [vmem:[%s2] sm:$0xf] %vm138, 0.0
      $region32: #{yolox_head_forward.2} parent=27 // pred_fallthru
        _
      %v140 = vld [vmem:[%s129] sm:$0xf]
      %v141 = vld [vmem:[%s129 + $0x4] sm:$0xf]
      %v142 = vld [vmem:[%s129 + $0x8] sm:$0xf]
      %v143 = vld [vmem:[%s129 + $0xc] sm:$0xf]
      %v144 = vld [vmem:[%s129 + $0x10] sm:$0xf]
      %v145 = vld [vmem:[%s129 + $0x14] sm:$0xf]
      %v146 = vld [vmem:[%s129 + $0x18] sm:$0xf]
      %v147 = vld [vmem:[%s129 + $0x1c] sm:$0xf]
      %v148 = vld [vmem:[%s129 + $0x20] sm:$0xf]
      %v149 = vld [vmem:[%s129 + $0x24] sm:$0xf]
      %v150 = vld [vmem:[%s129 + $0x28] sm:$0xf]
      %v151 = vld [vmem:[%s129 + $0x2c] sm:$0xf]
      %v152 = vld [vmem:[%s129 + $0x30] sm:$0xf]
      %v153 = vld [vmem:[%s129 + $0x34] sm:$0xf]
      %v154 = vld [vmem:[%s129 + $0x38] sm:$0xf]
      %v155 = vld [vmem:[%s129 + $0x3c] sm:$0xf]
      %v156 = vld [vmem:[%s1] sm:$0xff]
      %v157 = vld [vmem:[%s1 + $0x8] sm:$0xff]
      %v158 = vld [vmem:[%s1 + $0x10] sm:$0xff]
      %v159 = vld [vmem:[%s1 + $0x18] sm:$0xff]
      %v160 = vld [vmem:[%s1 + $0x20] sm:$0x33]
      %v177 = vunpack.c.l.b16 %v140
      %v178 = vunpack.c.l.b16 %v141
      %v179 = vunpack.c.l.b16 %v142
      %v180 = vunpack.c.l.b16 %v143
      %v181 = vunpack.c.l.b16 %v144
      %v182 = vunpack.c.l.b16 %v145
      %v183 = vunpack.c.l.b16 %v146
      %v184 = vunpack.c.l.b16 %v147
      %v185 = vunpack.c.l.b16 %v148
      %v186 = vunpack.c.l.b16 %v149
      %v187 = vunpack.c.l.b16 %v150
      %v188 = vunpack.c.l.b16 %v151
      %v189 = vunpack.c.l.b16 %v152
      %v190 = vunpack.c.l.b16 %v153
      %v191 = vunpack.c.l.b16 %v154
      %v192 = vunpack.c.l.b16 %v155
      %v193 = vpack.c.b16 %v178, %v177
      %v194 = vpack.c.b16 %v180, %v179
      %v195 = vpack.c.b16 %v182, %v181
      %v196 = vpack.c.b16 %v184, %v183
      %v197 = vpack.c.b16 %v186, %v185
      %v198 = vpack.c.b16 %v188, %v187
      %v199 = vpack.c.b16 %v190, %v189
      %v200 = vpack.c.b16 %v192, %v191
      %v206 = vunpack.c.l.b16 %v156
      %v207 = vunpack.c.h.b16 %v156
      %v208 = vunpack.c.l.b16 %v157
      %v209 = vunpack.c.h.b16 %v157
      %v210 = vunpack.c.l.b16 %v158
      %v211 = vunpack.c.h.b16 %v158
      %v212 = vunpack.c.l.b16 %v159
      %v213 = vunpack.c.h.b16 %v159
      %v214 = vunpack.c.l.b16 %v160
      %v215 = vunpack.c.h.b16 %v160
      %v216 = vpack.c.b16 %v208, %v206
      %v217 = vpack.c.b16 %v209, %v207
      %v218 = vpack.c.b16 %v212, %v210
      %v219 = vpack.c.b16 %v213, %v211
      %v220 = vpack.c.b16 %v214, %v214
      %v221 = vpack.c.b16 %v215, %v215
      %vm226 = vcmask 293888
      %v228 = vsel %vm226, %v193, 0
      %v231 = vsel %vm226, %v194, 0
      %v234 = vsel %vm226, %v195, 0
      %v237 = vsel %vm226, %v196, 0
      %v240 = vsel %vm226, %v197, 0
      %v243 = vsel %vm226, %v198, 0
      %v246 = vsel %vm226, %v199, 0
      %v249 = vsel %vm226, %v200, 0
      %vm251 = vcmask 1041408
      %v253 = vsel %vm251, %v220, 0
      %v256 = vsel %vm251, %v221, 0
      %258 = vmatpush.bf16.msra.mxu0 0
      %259 = vmatpush.bf16.msra.mxu0 0
      %260 = vmatpush.bf16.msra.mxu0 0
      %261 = vmatpush.bf16.msra.mxu0 0
      %262 = vmatpush.bf16.msra.mxu0 0
      %263 = vmatpush.bf16.msra.mxu0 %v253
      %264 = vmatpush.bf16.msra.mxu0 %v218
      %265 = vmatpush.bf16.msra.mxu0 %v216
      %266 = vmatmul.bf16.gmra.mxu0 %v228
      %v267 = vpop.f32.mrf.mxu0
      %v268 = vadd.f32 0.0, %v267
      %v269 = vpop.f32.mrf.mxu0
      %v270 = vadd.f32 0.0, %v269
      %271 = vmatmul.bf16.gmra.mxu0 %v231
      %v272 = vpop.f32.mrf.mxu0
      %v273 = vadd.f32 0.0, %v272
      %v274 = vpop.f32.mrf.mxu0
      %v275 = vadd.f32 0.0, %v274
      %276 = vmatmul.bf16.gmra.mxu0 %v234
      %v277 = vpop.f32.mrf.mxu0
      %v278 = vadd.f32 0.0, %v277
      %v279 = vpop.f32.mrf.mxu0
      %v280 = vadd.f32 0.0, %v279
      %281 = vmatmul.bf16.gmra.mxu0 %v237
      %v282 = vpop.f32.mrf.mxu0
      %v283 = vadd.f32 0.0, %v282
      %v284 = vpop.f32.mrf.mxu0
      %v285 = vadd.f32 0.0, %v284
      %286 = vmatmul.bf16.gmra.mxu0 %v240
      %v287 = vpop.f32.mrf.mxu0
      %v288 = vadd.f32 0.0, %v287
      %v289 = vpop.f32.mrf.mxu0
      %v290 = vadd.f32 0.0, %v289
      %291 = vmatmul.bf16.gmra.mxu0 %v243
      %v292 = vpop.f32.mrf.mxu0
      %v293 = vadd.f32 0.0, %v292
      %v294 = vpop.f32.mrf.mxu0
      %v295 = vadd.f32 0.0, %v294
      %296 = vmatmul.bf16.gmra.mxu0 %v246
      %v297 = vpop.f32.mrf.mxu0
      %v298 = vadd.f32 0.0, %v297
      %v299 = vpop.f32.mrf.mxu0
      %v300 = vadd.f32 0.0, %v299
      %301 = vmatmul.bf16.gmra.mxu0 %v249
      %v302 = vpop.f32.mrf.mxu0
      %v303 = vadd.f32 0.0, %v302
      %v304 = vpop.f32.mrf.mxu0
      %v305 = vadd.f32 0.0, %v304
      %306 = vdwg.mxu0
      %307 = vmatpush.bf16.msra.mxu0 0
      %308 = vmatpush.bf16.msra.mxu0 0
      %309 = vmatpush.bf16.msra.mxu0 0
      %310 = vmatpush.bf16.msra.mxu0 0
      %311 = vmatpush.bf16.msra.mxu0 0
      %312 = vmatpush.bf16.msra.mxu0 %v256
      %313 = vmatpush.bf16.msra.mxu0 %v219
      %314 = vmatpush.bf16.msra.mxu0 %v217
      %315 = vmatmul.bf16.gmra.mxu0 %v228
      %v316 = vpop.f32.mrf.mxu0
      %v317 = vadd.f32 0.0, %v316
      %v318 = vpop.f32.mrf.mxu0
      %v319 = vadd.f32 0.0, %v318
      %320 = vmatmul.bf16.gmra.mxu0 %v231
      %v321 = vpop.f32.mrf.mxu0
      %v322 = vadd.f32 0.0, %v321
      %v323 = vpop.f32.mrf.mxu0
      %v324 = vadd.f32 0.0, %v323
      %325 = vmatmul.bf16.gmra.mxu0 %v234
      %v326 = vpop.f32.mrf.mxu0
      %v327 = vadd.f32 0.0, %v326
      %v328 = vpop.f32.mrf.mxu0
      %v329 = vadd.f32 0.0, %v328
      %330 = vmatmul.bf16.gmra.mxu0 %v237
      %v331 = vpop.f32.mrf.mxu0
      %v332 = vadd.f32 0.0, %v331
      %v333 = vpop.f32.mrf.mxu0
      %v334 = vadd.f32 0.0, %v333
      %335 = vmatmul.bf16.gmra.mxu0 %v240
      %v336 = vpop.f32.mrf.mxu0
      %v337 = vadd.f32 0.0, %v336
      %v338 = vpop.f32.mrf.mxu0
      %v339 = vadd.f32 0.0, %v338
      %340 = vmatmul.bf16.gmra.mxu0 %v243
      %v341 = vpop.f32.mrf.mxu0
      %v342 = vadd.f32 0.0, %v341
      %v343 = vpop.f32.mrf.mxu0
      %v344 = vadd.f32 0.0, %v343
      %345 = vmatmul.bf16.gmra.mxu0 %v246
      %v346 = vpop.f32.mrf.mxu0
      %v347 = vadd.f32 0.0, %v346
      %v348 = vpop.f32.mrf.mxu0
      %v349 = vadd.f32 0.0, %v348
      %350 = vmatmul.bf16.gmra.mxu0 %v249
      %v351 = vpop.f32.mrf.mxu0
      %v352 = vadd.f32 0.0, %v351
      %v353 = vpop.f32.mrf.mxu0
      %v354 = vadd.f32 0.0, %v353
      %355 = vdwg.mxu0
      %v356 = vadd.f32 %v268, %v270
      %v357 = vadd.f32 %v356, %v273
      %v358 = vadd.f32 %v357, %v275
      %v359 = vadd.f32 %v358, %v278
      %v360 = vadd.f32 %v359, %v280
      %v361 = vadd.f32 %v360, %v283
      %v362 = vadd.f32 %v361, %v285
      %v363 = vadd.f32 %v362, %v288
      %v364 = vadd.f32 %v363, %v290
      %v365 = vadd.f32 %v364, %v293
      %v366 = vadd.f32 %v365, %v295
      %v367 = vadd.f32 %v366, %v298
      %v368 = vadd.f32 %v367, %v300
      %v369 = vadd.f32 %v368, %v303
      %v370 = vadd.f32 %v369, %v305
      %v371 = vrot.slane %v370, 4
      %v372 = vadd.f32 %v370, %v371
      %v373 = vrot.slane %v372, 2
      %v374 = vadd.f32 %v372, %v373
      %v375 = vrot.slane %v374, 1
      %v376 = vadd.f32 %v374, %v375
      %vm377 = vcmask 523264
      %v378 = vsel %vm377, %v317, 0.0
      %v379 = vsel %vm377, %v319, 0.0
      %v380 = vadd.f32 %v378, %v379
      %v381 = vsel %vm377, %v322, 0.0
      %v382 = vadd.f32 %v380, %v381
      %v383 = vsel %vm377, %v324, 0.0
      %v384 = vadd.f32 %v382, %v383
      %v385 = vsel %vm377, %v327, 0.0
      %v386 = vadd.f32 %v384, %v385
      %v387 = vsel %vm377, %v329, 0.0
      %v388 = vadd.f32 %v386, %v387
      %v389 = vsel %vm377, %v332, 0.0
      %v390 = vadd.f32 %v388, %v389
      %v391 = vsel %vm377, %v334, 0.0
      %v392 = vadd.f32 %v390, %v391
      %v393 = vsel %vm377, %v337, 0.0
      %v394 = vadd.f32 %v392, %v393
      %v395 = vsel %vm377, %v339, 0.0
      %v396 = vadd.f32 %v394, %v395
      %v397 = vsel %vm377, %v342, 0.0
      %v398 = vadd.f32 %v396, %v397
      %v399 = vsel %vm377, %v344, 0.0
      %v400 = vadd.f32 %v398, %v399
      %v401 = vsel %vm377, %v347, 0.0
      %v402 = vadd.f32 %v400, %v401
      %v403 = vsel %vm377, %v349, 0.0
      %v404 = vadd.f32 %v402, %v403
      %v405 = vsel %vm377, %v352, 0.0
      %v406 = vadd.f32 %v404, %v405
      %v407 = vsel %vm377, %v354, 0.0
      %v408 = vadd.f32 %v406, %v407
      %v409 = vrot.slane %v408, 4
      %v410 = vadd.f32 %v408, %v409
      %v411 = vrot.slane %v410, 2
      %v412 = vadd.f32 %v410, %v411
      %v413 = vrot.slane %v412, 1
      %v414 = vadd.f32 %v412, %v413
      %v415 = vmul.f32 %v268, %v268
      %v416 = vmul.f32 %v317, %v317
      %v417 = vmul.f32 %v270, %v270
      %v418 = vmul.f32 %v319, %v319
      %v419 = vmul.f32 %v273, %v273
      %v420 = vmul.f32 %v322, %v322
      %v421 = vmul.f32 %v275, %v275
      %v422 = vmul.f32 %v324, %v324
      %v423 = vmul.f32 %v278, %v278
      %v424 = vmul.f32 %v327, %v327
      %v425 = vmul.f32 %v280, %v280
      %v426 = vmul.f32 %v329, %v329
      %v427 = vmul.f32 %v283, %v283
      %v428 = vmul.f32 %v332, %v332
      %v429 = vmul.f32 %v285, %v285
      %v430 = vmul.f32 %v334, %v334
      %v431 = vmul.f32 %v288, %v288
      %v432 = vmul.f32 %v337, %v337
      %v433 = vmul.f32 %v290, %v290
      %v434 = vmul.f32 %v339, %v339
      %v435 = vmul.f32 %v293, %v293
      %v436 = vmul.f32 %v342, %v342
      %v437 = vmul.f32 %v295, %v295
      %v438 = vmul.f32 %v344, %v344
      %v439 = vmul.f32 %v298, %v298
      %v440 = vmul.f32 %v347, %v347
      %v441 = vmul.f32 %v300, %v300
      %v442 = vmul.f32 %v349, %v349
      %v443 = vmul.f32 %v303, %v303
      %v444 = vmul.f32 %v352, %v352
      %v445 = vmul.f32 %v305, %v305
      %v446 = vmul.f32 %v354, %v354
      %v447 = vadd.f32 %v415, %v417
      %v448 = vadd.f32 %v447, %v419
      %v449 = vadd.f32 %v448, %v421
      %v450 = vadd.f32 %v449, %v423
      %v451 = vadd.f32 %v450, %v425
      %v452 = vadd.f32 %v451, %v427
      %v453 = vadd.f32 %v452, %v429
      %v454 = vadd.f32 %v453, %v431
      %v455 = vadd.f32 %v454, %v433
      %v456 = vadd.f32 %v455, %v435
      %v457 = vadd.f32 %v456, %v437
      %v458 = vadd.f32 %v457, %v439
      %v459 = vadd.f32 %v458, %v441
      %v460 = vadd.f32 %v459, %v443
      %v461 = vadd.f32 %v460, %v445
      %v462 = vrot.slane %v461, 4
      %v463 = vadd.f32 %v461, %v462
      %v464 = vrot.slane %v463, 2
      %v465 = vadd.f32 %v463, %v464
      %v466 = vrot.slane %v465, 1
      %v467 = vadd.f32 %v465, %v466
      %v468 = vsel %vm377, %v416, 0.0
      %v469 = vsel %vm377, %v418, 0.0
      %v470 = vadd.f32 %v468, %v469
      %v471 = vsel %vm377, %v420, 0.0
      %v472 = vadd.f32 %v470, %v471
      %v473 = vsel %vm377, %v422, 0.0
      %v474 = vadd.f32 %v472, %v473
      %v475 = vsel %vm377, %v424, 0.0
      %v476 = vadd.f32 %v474, %v475
      %v477 = vsel %vm377, %v426, 0.0
      %v478 = vadd.f32 %v476, %v477
      %v479 = vsel %vm377, %v428, 0.0
      %v480 = vadd.f32 %v478, %v479
      %v481 = vsel %vm377, %v430, 0.0
      %v482 = vadd.f32 %v480, %v481
      %v483 = vsel %vm377, %v432, 0.0
      %v484 = vadd.f32 %v482, %v483
      %v485 = vsel %vm377, %v434, 0.0
      %v486 = vadd.f32 %v484, %v485
      %v487 = vsel %vm377, %v436, 0.0
      %v488 = vadd.f32 %v486, %v487
      %v489 = vsel %vm377, %v438, 0.0
      %v490 = vadd.f32 %v488, %v489
      %v491 = vsel %vm377, %v440, 0.0
      %v492 = vadd.f32 %v490, %v491
      %v493 = vsel %vm377, %v442, 0.0
      %v494 = vadd.f32 %v492, %v493
      %v495 = vsel %vm377, %v444, 0.0
      %v496 = vadd.f32 %v494, %v495
      %v497 = vsel %vm377, %v446, 0.0
      %v498 = vadd.f32 %v496, %v497
      %v499 = vrot.slane %v498, 4
      %v500 = vadd.f32 %v498, %v499
      %v501 = vrot.slane %v500, 2
      %v502 = vadd.f32 %v500, %v501
      %v503 = vrot.slane %v502, 1
      %v504 = vadd.f32 %v502, %v503
      %v505 = vld [vmem:[%s2] sm:$0xf]
      %vm506 = vcmask 1040384
      %v507 = vsel %vm506, %v376, %v467
      %v508 = vsel %vm506, %v414, %v504
      %v511 = vrot.slane %v508, 6
      %v512 = vsel %vm251, %v507, %v511
      %v514 = vadd.f32 %v505, %v512
      %vm515 = vcmask 519170
      %vm516 = vmor %vm515, %vm251
      %517 = vst.msk [vmem:[%s2] sm:$0xf] %vm516, %v514
      // Predicated region
      $region33: #{yolox_head_forward.2} parent=27 // pred_check
        %p518 = pneg %p73
      $region34: #{yolox_head_forward.2} parent=27 // pred_check_branch
        %520 = sbr.rel (%p518) target = $region36
      $region35: #{yolox_head_forward.2} parent=27 // pred_region
        _
      $region36: #{yolox_head_forward.2} parent=27 // pred_fallthru
        _
      // Predicated region
      $region37: #{yolox_head_forward.2} parent=27 // pred_check
        %p521 = pneg %p73
      $region38: #{yolox_head_forward.2} parent=27 // pred_check_branch
        %523 = sbr.rel (%p521) target = $region40
      $region39: #{yolox_head_forward.2} parent=27 // pred_region
        _
      $region40: #{yolox_head_forward.2} parent=27 // pred_fallthru
        _
    $region28: #{yolox_head_forward.2} parent=5 // pred_fallthru
      _
    %p524 = scmp.le.s32.totalorder 2, %s8
    // Predicated region
    $region41: #{yolox_head_forward.2} parent=5 // pred_check
      %p525 = pneg %p524
    $region42: #{yolox_head_forward.2} parent=5 // pred_check_branch
      %527 = sbr.rel (%p525) target = $region44
    $region43: #{yolox_head_forward.2} parent=5 // pred_region
      %s528 = ssub.s32 %s8, 2
    $region44: #{yolox_head_forward.2} parent=5 // pred_fallthru
      _
  $region6: #{yolox_head_forward.2} parent=0 // loop_footer
    %s12 = sadd.s32 1, %s8
  $region7: #{yolox_head_forward.2} parent=0 // loop_footer_branch
    %7 = sbr.rel target = $region3
  $region8: #{yolox_head_forward.2} parent=0 // loop_exit
    _

// kernel: yolox_head_forward.3
$region0: #{yolox_head_forward.3}
  #allocation0 [shape = 'u32[]', space=smem, size = 0x4, offset = 0x4, fixed_abs, tag = 'smem constant byte address 0x4 - core index']
  #allocation1 [shape = 'u32[72,128]{1,0:T(1,128)}', space=vmem, size = 0x9000, scoped, tag = 'internal scratch']
  %s0 = inlined_call_operand.vmem [shape: bf16[512,36], index: 0, kind: input, shape index: {}]
  %s1 = inlined_call_operand.vmem [shape: bf16[36,192], index: 1, kind: input, shape index: {}]
  %s2 = inlined_call_operand.vmem [shape: f32[1,192], index: 2, kind: input, shape index: {}]
  %s3 = inlined_call_operand.vmem [shape: f32[1,192], index: 3, kind: input, shape index: {}]
  %s4 = inlined_call_operand.vmem [shape: bf16[6,192], index: 4, kind: input, shape index: {}]
  %s5 = inlined_call_operand.vmem [shape: f32[6,1], index: 5, kind: input, shape index: {}]
  %s6 = inlined_call_operand.vmem [shape: f32[6,512], index: 6, kind: output, shape index: {}]
  %s7 = sld [smem:[#allocation0]]
  $region57: #{yolox_head_forward.3} parent=0
    _
  %s9 = ssub.s32 1, %s7
  %s10 = scalar_select 0, %s9, %s7
  loop: start=0, step=1, limit=6
  $region2: #{yolox_head_forward.3} parent=0 // loop_pre_header
    _
  $region3: #{yolox_head_forward.3} parent=0 // loop_header
    %s12 = sphi 0, %s16
    %p13 = scmp.ge.s32.totalorder %s12, 6
    %s22 = sphi 0, %s24
    %s25 = sphi 0, %s22
    %s26 = sphi 0, %s25
    %s42 = sphi 0, %s26
    %s46 = sphi 0, %s46
    %s48 = sphi 0, %s46
    %s49 = sphi 0, %s48
    %s63 = sphi 0, %s49
    %s67 = sphi 0, %s67
    %s69 = sphi 0, %s67
    %s70 = sphi 0, %s69
    %s84 = sphi 0, %s70
    %s88 = sphi 0, %s88
    %s90 = sphi 0, %s88
    %s91 = sphi 0, %s90
    %s105 = sphi 0, %s91
    %s109 = sphi 0, %s109
    %s111 = sphi 0, %s109
    %s112 = sphi 0, %s111
    %s126 = sphi 0, %s112
    %s130 = sphi 0, %s130
    %s132 = sphi 0, %s130
    %s133 = sphi 0, %s132
    %s147 = sphi 0, %s133
    %s153 = sphi 0, %s155
    %s156 = sphi 0, %s153
    %s157 = sphi 0, %s156
    %s173 = sphi 0, %s157
  $region4: #{yolox_head_forward.3} parent=0 // loop_header_branch
    %15 = sbr.rel (%p13) target = $region8
  $region5: #{yolox_head_forward.3} parent=0 // loop_body
    %s17 = ssub.s32 %s12, 1
    %s18 = ssub.s32 %s12, 2
    %s19 = sadd.s32 %s12, 1
    %s20 = ssub.s32 %s12, %s19
    %p21 = scmp.eq.s32.totalorder %s20, 0
    %s23 = sadd.s32 %s22, 1
    %s24 = scalar_select %p21, %s22, %s23
    %p27 = pneg %p21
    %p28 = scmp.eq.s32.totalorder %s12, 3
    %p29 = por %p27, %p28
    %p30 = scmp.ne.s32.totalorder %s22, %s25
    %p31 = scmp.eq.s32.totalorder %s12, 0
    %p32 = por %p30, %p31
    %p33 = scmp.ne.s32.totalorder %s22, %s25
    %p34 = scmp.eq.s32.totalorder %s17, 3
    %p35 = por %p33, %p34
    %p36 = scmp.ne.s32.totalorder %s25, %s26
    %p37 = scmp.eq.s32.totalorder %s17, 0
    %p38 = por %p36, %p37
    %p39 = scmp.ne.s32.totalorder %s25, %s26
    %p40 = scmp.eq.s32.totalorder %s18, 3
    %p41 = por %p39, %p40
    %p43 = scmp.ne.s32.totalorder %s26, %s42
    %p44 = scmp.eq.s32.totalorder %s18, 0
    %p45 = por %p43, %p44
    %s47 = sadd.s32 %s46, 1
    %p50 = scmp.eq.s32.totalorder %s12, 3
    %p51 = scmp.ne.s32.totalorder %s46, %s48
    %p52 = scmp.eq.s32.totalorder %s12, 0
    %p53 = por %p51, %p52
    %p54 = scmp.ne.s32.totalorder %s46, %s48
    %p55 = scmp.eq.s32.totalorder %s17, 3
    %p56 = por %p54, %p55
    %p57 = scmp.ne.s32.totalorder %s48, %s49
    %p58 = scmp.eq.s32.totalorder %s17, 0
    %p59 = por %p57, %p58
    %p60 = scmp.ne.s32.totalorder %s48, %s49
    %p61 = scmp.eq.s32.totalorder %s18, 3
    %p62 = por %p60, %p61
    %p64 = scmp.ne.s32.totalorder %s49, %s63
    %p65 = scmp.eq.s32.totalorder %s18, 0
    %p66 = por %p64, %p65
    %s68 = sadd.s32 %s67, 1
    %p71 = scmp.eq.s32.totalorder %s12, 3
    %p72 = scmp.ne.s32.totalorder %s67, %s69
    %p73 = scmp.eq.s32.totalorder %s12, 0
    %p74 = por %p72, %p73
    %p75 = scmp.ne.s32.totalorder %s67, %s69
    %p76 = scmp.eq.s32.totalorder %s17, 3
    %p77 = por %p75, %p76
    %p78 = scmp.ne.s32.totalorder %s69, %s70
    %p79 = scmp.eq.s32.totalorder %s17, 0
    %p80 = por %p78, %p79
    %p81 = scmp.ne.s32.totalorder %s69, %s70
    %p82 = scmp.eq.s32.totalorder %s18, 3
    %p83 = por %p81, %p82
    %p85 = scmp.ne.s32.totalorder %s70, %s84
    %p86 = scmp.eq.s32.totalorder %s18, 0
    %p87 = por %p85, %p86
    %s89 = sadd.s32 %s88, 1
    %p92 = scmp.eq.s32.totalorder %s12, 3
    %p93 = scmp.ne.s32.totalorder %s88, %s90
    %p94 = scmp.eq.s32.totalorder %s12, 0
    %p95 = por %p93, %p94
    %p96 = scmp.ne.s32.totalorder %s88, %s90
    %p97 = scmp.eq.s32.totalorder %s17, 3
    %p98 = por %p96, %p97
    %p99 = scmp.ne.s32.totalorder %s90, %s91
    %p100 = scmp.eq.s32.totalorder %s17, 0
    %p101 = por %p99, %p100
    %p102 = scmp.ne.s32.totalorder %s90, %s91
    %p103 = scmp.eq.s32.totalorder %s18, 3
    %p104 = por %p102, %p103
    %p106 = scmp.ne.s32.totalorder %s91, %s105
    %p107 = scmp.eq.s32.totalorder %s18, 0
    %p108 = por %p106, %p107
    %s110 = sadd.s32 %s109, 1
    %p113 = scmp.eq.s32.totalorder %s12, 3
    %p114 = scmp.ne.s32.totalorder %s109, %s111
    %p115 = scmp.eq.s32.totalorder %s12, 0
    %p116 = por %p114, %p115
    %p117 = scmp.ne.s32.totalorder %s109, %s111
    %p118 = scmp.eq.s32.totalorder %s17, 3
    %p119 = por %p117, %p118
    %p120 = scmp.ne.s32.totalorder %s111, %s112
    %p121 = scmp.eq.s32.totalorder %s17, 0
    %p122 = por %p120, %p121
    %p123 = scmp.ne.s32.totalorder %s111, %s112
    %p124 = scmp.eq.s32.totalorder %s18, 3
    %p125 = por %p123, %p124
    %p127 = scmp.ne.s32.totalorder %s112, %s126
    %p128 = scmp.eq.s32.totalorder %s18, 0
    %p129 = por %p127, %p128
    %s131 = sadd.s32 %s130, 1
    %p134 = scmp.eq.s32.totalorder %s12, 3
    %p135 = scmp.ne.s32.totalorder %s130, %s132
    %p136 = scmp.eq.s32.totalorder %s12, 0
    %p137 = por %p135, %p136
    %p138 = scmp.ne.s32.totalorder %s130, %s132
    %p139 = scmp.eq.s32.totalorder %s17, 3
    %p140 = por %p138, %p139
    %p141 = scmp.ne.s32.totalorder %s132, %s133
    %p142 = scmp.eq.s32.totalorder %s17, 0
    %p143 = por %p141, %p142
    %p144 = scmp.ne.s32.totalorder %s132, %s133
    %p145 = scmp.eq.s32.totalorder %s18, 3
    %p146 = por %p144, %p145
    %p148 = scmp.ne.s32.totalorder %s133, %s147
    %p149 = scmp.eq.s32.totalorder %s18, 0
    %p150 = por %p148, %p149
    %s151 = ssub.s32 %s12, %s19
    %p152 = scmp.eq.s32.totalorder %s151, 0
    %s154 = sadd.s32 %s153, 1
    %s155 = scalar_select %p152, %s153, %s154
    %p158 = pneg %p152
    %p159 = scmp.eq.s32.totalorder %s12, 3
    %p160 = por %p158, %p159
    %p161 = scmp.ne.s32.totalorder %s153, %s156
    %p162 = scmp.eq.s32.totalorder %s12, 0
    %p163 = por %p161, %p162
    %p164 = scmp.ne.s32.totalorder %s153, %s156
    %p165 = scmp.eq.s32.totalorder %s17, 3
    %p166 = por %p164, %p165
    %p167 = scmp.ne.s32.totalorder %s156, %s157
    %p168 = scmp.eq.s32.totalorder %s17, 0
    %p169 = por %p167, %p168
    %p170 = scmp.ne.s32.totalorder %s156, %s157
    %p171 = scmp.eq.s32.totalorder %s18, 3
    %p172 = por %p170, %p171
    %p174 = scmp.ne.s32.totalorder %s157, %s173
    %p175 = scmp.eq.s32.totalorder %s18, 0
    %p176 = por %p174, %p175
    %p177 = scmp.le.s32.totalorder 1, %s12
    %p178 = scmp.lt.s32.totalorder %s12, 5
    %p179 = pnand %p177, %p178
    %p180 = pneg %p179
    // Predicated region
    $region9: #{yolox_head_forward.3} parent=5 // pred_check
      _
    $region10: #{yolox_head_forward.3} parent=5 // pred_check_branch
      %182 = sbr.rel (%p179) target = $region12
    $region11: #{yolox_head_forward.3} parent=5 // pred_region
      %s183 = ssub.s32 %s12, 1
      // Predicated region
      $region13: #{yolox_head_forward.3} parent=11 // pred_check
        %p184 = pneg %p59
      $region14: #{yolox_head_forward.3} parent=11 // pred_check_branch
        %186 = sbr.rel (%p184) target = $region16
      $region15: #{yolox_head_forward.3} parent=11 // pred_region
        _
      $region16: #{yolox_head_forward.3} parent=11 // pred_fallthru
        _
      // Predicated region
      $region17: #{yolox_head_forward.3} parent=11 // pred_check
        %p187 = pneg %p80
      $region18: #{yolox_head_forward.3} parent=11 // pred_check_branch
        %189 = sbr.rel (%p187) target = $region20
      $region19: #{yolox_head_forward.3} parent=11 // pred_region
        _
      $region20: #{yolox_head_forward.3} parent=11 // pred_fallthru
        _
      // Predicated region
      $region21: #{yolox_head_forward.3} parent=11 // pred_check
        %p190 = pneg %p101
      $region22: #{yolox_head_forward.3} parent=11 // pred_check_branch
        %192 = sbr.rel (%p190) target = $region24
      $region23: #{yolox_head_forward.3} parent=11 // pred_region
        _
      $region24: #{yolox_head_forward.3} parent=11 // pred_fallthru
        _
      // Predicated region
      $region25: #{yolox_head_forward.3} parent=11 // pred_check
        %p193 = pneg %p122
      $region26: #{yolox_head_forward.3} parent=11 // pred_check_branch
        %195 = sbr.rel (%p193) target = $region28
      $region27: #{yolox_head_forward.3} parent=11 // pred_region
        _
      $region28: #{yolox_head_forward.3} parent=11 // pred_fallthru
        _
      // Predicated region
      $region29: #{yolox_head_forward.3} parent=11 // pred_check
        %p196 = pneg %p143
      $region30: #{yolox_head_forward.3} parent=11 // pred_check_branch
        %198 = sbr.rel (%p196) target = $region32
      $region31: #{yolox_head_forward.3} parent=11 // pred_region
        _
      $region32: #{yolox_head_forward.3} parent=11 // pred_fallthru
        _
    $region12: #{yolox_head_forward.3} parent=5 // pred_fallthru
      _
    %p199 = scmp.lt.s32.totalorder %s12, 4
    // Predicated region
    $region33: #{yolox_head_forward.3} parent=5 // pred_check
      %p200 = pneg %p199
    $region34: #{yolox_head_forward.3} parent=5 // pred_check_branch
      %202 = sbr.rel (%p200) target = $region36
    $region35: #{yolox_head_forward.3} parent=5 // pred_region
      // Predicated region
      $region37: #{yolox_head_forward.3} parent=35 // pred_check
        %p203 = pneg %p32
      $region38: #{yolox_head_forward.3} parent=35 // pred_check_branch
        %205 = sbr.rel (%p203) target = $region40
      $region39: #{yolox_head_forward.3} parent=35 // pred_region
        %s206 = smul.u32 16, %s12
        %p207 = scmp.lt.s32.totalorder %s206, 63
        %s208 = scalar_select %p207, %s206, 63
        %s209 = smul.addr %s208, 4
        %s210 = scalar_lea.vmem %s0, %s209
        %s211 = smul.u32 16, %s12
      $region40: #{yolox_head_forward.3} parent=35 // pred_fallthru
        _
    $region36: #{yolox_head_forward.3} parent=5 // pred_fallthru
      _
    %p212 = scmp.le.s32.totalorder 1, %s12
    %p213 = scmp.lt.s32.totalorder %s12, 5
    %p214 = pnand %p212, %p213
    %p215 = pneg %p214
    // Predicated region
    $region41: #{yolox_head_forward.3} parent=5 // pred_check
      _
    $region42: #{yolox_head_forward.3} parent=5 // pred_check_branch
      %217 = sbr.rel (%p214) target = $region44
    $region43: #{yolox_head_forward.3} parent=5 // pred_region
      %s218 = ssub.s32 %s12, 1
      %s219 = smul.u32 16, %s17
      %p220 = scmp.lt.s32.totalorder %s219, 63
      %s221 = scalar_select %p220, %s219, 63
      %s222 = smul.addr %s221, 4
      %s223 = scalar_lea.vmem %s0, %s222
      %p224 = pneg %p38
      %p225 = pneg %p35
      %p226 = pneg %p59
      %p227 = pneg %p56
      %p228 = pneg %p80
      %p229 = pneg %p77
      %p230 = pneg %p101
      %p231 = pneg %p98
      %p232 = pneg %p122
      %p233 = pneg %p119
      %p234 = pneg %p143
      %p235 = pneg %p140
      %p236 = pneg %p169
      %p237 = pneg %p166
      %p238 = scmp.lt.s32.totalorder %s17, 3
      %s239 = scalar_select %p238, %s17, 3
      %s240 = smul.addr %s239, 8
      %s241 = scalar_lea.vmem %s6, %s240
      %s242 = smul.u32 16, %s17
      %p243 = scmp.lt.s32.totalorder %s242, 63
      %s244 = scalar_select %p243, %s242, 63
      %s245 = smul.addr %s244, 4
      %s246 = scalar_lea.vmem %s0, %s245
      %s247 = smul.u32 16, %s17
      %p248 = scmp.lt.s32.totalorder %s17, 3
      %s249 = scalar_select %p248, %s17, 3
      %s250 = smul.addr %s249, 8
      %s251 = scalar_lea.vmem %s6, %s250
      %v253 = vld [vmem:[%s246] sm:$0xf]
      %v254 = vld [vmem:[%s246 + $0x4] sm:$0xf]
      %v255 = vld [vmem:[%s246 + $0x8] sm:$0xf]
      %v256 = vld [vmem:[%s246 + $0xc] sm:$0xf]
      %v257 = vld [vmem:[%s246 + $0x10] sm:$0xf]
      %v258 = vld [vmem:[%s246 + $0x14] sm:$0xf]
      %v259 = vld [vmem:[%s246 + $0x18] sm:$0xf]
      %v260 = vld [vmem:[%s246 + $0x1c] sm:$0xf]
      %v261 = vld [vmem:[%s246 + $0x20] sm:$0xf]
      %v262 = vld [vmem:[%s246 + $0x24] sm:$0xf]
      %v263 = vld [vmem:[%s246 + $0x28] sm:$0xf]
      %v264 = vld [vmem:[%s246 + $0x2c] sm:$0xf]
      %v265 = vld [vmem:[%s246 + $0x30] sm:$0xf]
      %v266 = vld [vmem:[%s246 + $0x34] sm:$0xf]
      %v267 = vld [vmem:[%s246 + $0x38] sm:$0xf]
      %v268 = vld [vmem:[%s246 + $0x3c] sm:$0xf]
      %v269 = vld [vmem:[%s1] sm:$0xff]
      %v270 = vld [vmem:[%s1 + $0x8] sm:$0xff]
      %v271 = vld [vmem:[%s1 + $0x10] sm:$0xff]
      %v272 = vld [vmem:[%s1 + $0x18] sm:$0xff]
      %v273 = vld [vmem:[%s1 + $0x20] sm:$0x33]
      %v290 = vunpack.c.l.b16 %v253
      %v291 = vunpack.c.l.b16 %v254
      %v292 = vunpack.c.l.b16 %v255
      %v293 = vunpack.c.l.b16 %v256
      %v294 = vunpack.c.l.b16 %v257
      %v295 = vunpack.c.l.b16 %v258
      %v296 = vunpack.c.l.b16 %v259
      %v297 = vunpack.c.l.b16 %v260
      %v298 = vunpack.c.l.b16 %v261
      %v299 = vunpack.c.l.b16 %v262
      %v300 = vunpack.c.l.b16 %v263
      %v301 = vunpack.c.l.b16 %v264
      %v302 = vunpack.c.l.b16 %v265
      %v303 = vunpack.c.l.b16 %v266
      %v304 = vunpack.c.l.b16 %v267
      %v305 = vunpack.c.l.b16 %v268
      %v306 = vpack.c.b16 %v291, %v290
      %v307 = vpack.c.b16 %v293, %v292
      %v308 = vpack.c.b16 %v295, %v294
      %v309 = vpack.c.b16 %v297, %v296
      %v310 = vpack.c.b16 %v299, %v298
      %v311 = vpack.c.b16 %v301, %v300
      %v312 = vpack.c.b16 %v303, %v302
      %v313 = vpack.c.b16 %v305, %v304
      %v319 = vunpack.c.l.b16 %v269
      %v320 = vunpack.c.h.b16 %v269
      %v321 = vunpack.c.l.b16 %v270
      %v322 = vunpack.c.h.b16 %v270
      %v323 = vunpack.c.l.b16 %v271
      %v324 = vunpack.c.h.b16 %v271
      %v325 = vunpack.c.l.b16 %v272
      %v326 = vunpack.c.h.b16 %v272
      %v327 = vunpack.c.l.b16 %v273
      %v328 = vunpack.c.h.b16 %v273
      %v329 = vpack.c.b16 %v321, %v319
      %v330 = vpack.c.b16 %v322, %v320
      %v331 = vpack.c.b16 %v325, %v323
      %v332 = vpack.c.b16 %v326, %v324
      %v333 = vpack.c.b16 %v327, %v327
      %v334 = vpack.c.b16 %v328, %v328
      %vm339 = vcmask 293888
      %v341 = vsel %vm339, %v306, 0
      %v344 = vsel %vm339, %v307, 0
      %v347 = vsel %vm339, %v308, 0
      %v350 = vsel %vm339, %v309, 0
      %v353 = vsel %vm339, %v310, 0
      %v356 = vsel %vm339, %v311, 0
      %v359 = vsel %vm339, %v312, 0
      %v362 = vsel %vm339, %v313, 0
      %vm364 = vcmask 1041408
      %v366 = vsel %vm364, %v333, 0
      %v369 = vsel %vm364, %v334, 0
      %371 = vmatpush.bf16.msra.mxu0 0
      %372 = vmatpush.bf16.msra.mxu0 0
      %373 = vmatpush.bf16.msra.mxu0 0
      %374 = vmatpush.bf16.msra.mxu0 0
      %375 = vmatpush.bf16.msra.mxu0 0
      %376 = vmatpush.bf16.msra.mxu0 %v366
      %377 = vmatpush.bf16.msra.mxu0 %v331
      %378 = vmatpush.bf16.msra.mxu0 %v329
      %379 = vmatmul.bf16.gmra.mxu0 %v341
      %v380 = vpop.f32.mrf.mxu0
      %v381 = vadd.f32 0.0, %v380
      %v382 = vpop.f32.mrf.mxu0
      %v383 = vadd.f32 0.0, %v382
      %384 = vmatmul.bf16.gmra.mxu0 %v344
      %v385 = vpop.f32.mrf.mxu0
      %v386 = vadd.f32 0.0, %v385
      %v387 = vpop.f32.mrf.mxu0
      %v388 = vadd.f32 0.0, %v387
      %389 = vmatmul.bf16.gmra.mxu0 %v347
      %v390 = vpop.f32.mrf.mxu0
      %v391 = vadd.f32 0.0, %v390
      %v392 = vpop.f32.mrf.mxu0
      %v393 = vadd.f32 0.0, %v392
      %394 = vmatmul.bf16.gmra.mxu0 %v350
      %v395 = vpop.f32.mrf.mxu0
      %v396 = vadd.f32 0.0, %v395
      %v397 = vpop.f32.mrf.mxu0
      %v398 = vadd.f32 0.0, %v397
      %399 = vmatmul.bf16.gmra.mxu0 %v353
      %v400 = vpop.f32.mrf.mxu0
      %v401 = vadd.f32 0.0, %v400
      %v402 = vpop.f32.mrf.mxu0
      %v403 = vadd.f32 0.0, %v402
      %404 = vmatmul.bf16.gmra.mxu0 %v356
      %v405 = vpop.f32.mrf.mxu0
      %v406 = vadd.f32 0.0, %v405
      %v407 = vpop.f32.mrf.mxu0
      %v408 = vadd.f32 0.0, %v407
      %409 = vmatmul.bf16.gmra.mxu0 %v359
      %v410 = vpop.f32.mrf.mxu0
      %v411 = vadd.f32 0.0, %v410
      %v412 = vpop.f32.mrf.mxu0
      %v413 = vadd.f32 0.0, %v412
      %414 = vmatmul.bf16.gmra.mxu0 %v362
      %v415 = vpop.f32.mrf.mxu0
      %v416 = vadd.f32 0.0, %v415
      %v417 = vpop.f32.mrf.mxu0
      %v418 = vadd.f32 0.0, %v417
      %419 = vdwg.mxu0
      %420 = vmatpush.bf16.msra.mxu0 0
      %421 = vmatpush.bf16.msra.mxu0 0
      %422 = vmatpush.bf16.msra.mxu0 0
      %423 = vmatpush.bf16.msra.mxu0 0
      %424 = vmatpush.bf16.msra.mxu0 0
      %425 = vmatpush.bf16.msra.mxu0 %v369
      %426 = vmatpush.bf16.msra.mxu0 %v332
      %427 = vmatpush.bf16.msra.mxu0 %v330
      %428 = vmatmul.bf16.gmra.mxu0 %v341
      %v429 = vpop.f32.mrf.mxu0
      %v430 = vadd.f32 0.0, %v429
      %v431 = vpop.f32.mrf.mxu0
      %v432 = vadd.f32 0.0, %v431
      %433 = vmatmul.bf16.gmra.mxu0 %v344
      %v434 = vpop.f32.mrf.mxu0
      %v435 = vadd.f32 0.0, %v434
      %v436 = vpop.f32.mrf.mxu0
      %v437 = vadd.f32 0.0, %v436
      %438 = vmatmul.bf16.gmra.mxu0 %v347
      %v439 = vpop.f32.mrf.mxu0
      %v440 = vadd.f32 0.0, %v439
      %v441 = vpop.f32.mrf.mxu0
      %v442 = vadd.f32 0.0, %v441
      %443 = vmatmul.bf16.gmra.mxu0 %v350
      %v444 = vpop.f32.mrf.mxu0
      %v445 = vadd.f32 0.0, %v444
      %v446 = vpop.f32.mrf.mxu0
      %v447 = vadd.f32 0.0, %v446
      %448 = vmatmul.bf16.gmra.mxu0 %v353
      %v449 = vpop.f32.mrf.mxu0
      %v450 = vadd.f32 0.0, %v449
      %v451 = vpop.f32.mrf.mxu0
      %v452 = vadd.f32 0.0, %v451
      %453 = vmatmul.bf16.gmra.mxu0 %v356
      %v454 = vpop.f32.mrf.mxu0
      %v455 = vadd.f32 0.0, %v454
      %v456 = vpop.f32.mrf.mxu0
      %v457 = vadd.f32 0.0, %v456
      %458 = vmatmul.bf16.gmra.mxu0 %v359
      %v459 = vpop.f32.mrf.mxu0
      %v460 = vadd.f32 0.0, %v459
      %v461 = vpop.f32.mrf.mxu0
      %v462 = vadd.f32 0.0, %v461
      %463 = vmatmul.bf16.gmra.mxu0 %v362
      %v464 = vpop.f32.mrf.mxu0
      %v465 = vadd.f32 0.0, %v464
      %v466 = vpop.f32.mrf.mxu0
      %v467 = vadd.f32 0.0, %v466
      %468 = vdwg.mxu0
      %v469 = vld [vmem:[%s2] sm:$0x3]
      %v471 = vperm.slane %v469, 0
      %v472 = vperm.slane %v469, 1
      %v475 = vmul.f32 %v381, %v471
      %v476 = vmul.f32 %v430, %v472
      %v477 = vmul.f32 %v383, %v471
      %v478 = vmul.f32 %v432, %v472
      %v479 = vmul.f32 %v386, %v471
      %v480 = vmul.f32 %v435, %v472
      %v481 = vmul.f32 %v388, %v471
      %v482 = vmul.f32 %v437, %v472
      %v483 = vmul.f32 %v391, %v471
      %v484 = vmul.f32 %v440, %v472
      %v485 = vmul.f32 %v393, %v471
      %v486 = vmul.f32 %v442, %v472
      %v487 = vmul.f32 %v396, %v471
      %v488 = vmul.f32 %v445, %v472
      %v489 = vmul.f32 %v398, %v471
      %v490 = vmul.f32 %v447, %v472
      %v491 = vmul.f32 %v401, %v471
      %v492 = vmul.f32 %v450, %v472
      %v493 = vmul.f32 %v403, %v471
      %v494 = vmul.f32 %v452, %v472
      %v495 = vmul.f32 %v406, %v471
      %v496 = vmul.f32 %v455, %v472
      %v497 = vmul.f32 %v408, %v471
      %v498 = vmul.f32 %v457, %v472
      %v499 = vmul.f32 %v411, %v471
      %v500 = vmul.f32 %v460, %v472
      %v501 = vmul.f32 %v413, %v471
      %v502 = vmul.f32 %v462, %v472
      %v503 = vmul.f32 %v416, %v471
      %v504 = vmul.f32 %v465, %v472
      %v505 = vmul.f32 %v418, %v471
      %v506 = vmul.f32 %v467, %v472
      %v507 = vld [vmem:[%s3] sm:$0x3]
      %v509 = vperm.slane %v507, 0
      %v510 = vperm.slane %v507, 1
      %v513 = vadd.f32 %v475, %v509
      %v514 = vadd.f32 %v476, %v510
      %v515 = vadd.f32 %v477, %v509
      %v516 = vadd.f32 %v478, %v510
      %v517 = vadd.f32 %v479, %v509
      %v518 = vadd.f32 %v480, %v510
      %v519 = vadd.f32 %v481, %v509
      %v520 = vadd.f32 %v482, %v510
      %v521 = vadd.f32 %v483, %v509
      %v522 = vadd.f32 %v484, %v510
      %v523 = vadd.f32 %v485, %v509
      %v524 = vadd.f32 %v486, %v510
      %v525 = vadd.f32 %v487, %v509
      %v526 = vadd.f32 %v488, %v510
      %v527 = vadd.f32 %v489, %v509
      %v528 = vadd.f32 %v490, %v510
      %v529 = vadd.f32 %v491, %v509
      %v530 = vadd.f32 %v492, %v510
      %v531 = vadd.f32 %v493, %v509
      %v532 = vadd.f32 %v494, %v510
      %v533 = vadd.f32 %v495, %v509
      %v534 = vadd.f32 %v496, %v510
      %v535 = vadd.f32 %v497, %v509
      %v536 = vadd.f32 %v498, %v510
      %v537 = vadd.f32 %v499, %v509
      %v538 = vadd.f32 %v500, %v510
      %v539 = vadd.f32 %v501, %v509
      %v540 = vadd.f32 %v502, %v510
      %v541 = vadd.f32 %v503, %v509
      %v542 = vadd.f32 %v504, %v510
      %v543 = vadd.f32 %v505, %v509
      %v544 = vadd.f32 %v506, %v510
      %v545 = vmax.f32 %v513, 0.0
      %v546 = vmax.f32 %v514, 0.0
      %v547 = vmax.f32 %v515, 0.0
      %v548 = vmax.f32 %v516, 0.0
      %v549 = vmax.f32 %v517, 0.0
      %v550 = vmax.f32 %v518, 0.0
      %v551 = vmax.f32 %v519, 0.0
      %v552 = vmax.f32 %v520, 0.0
      %v553 = vmax.f32 %v521, 0.0
      %v554 = vmax.f32 %v522, 0.0
      %v555 = vmax.f32 %v523, 0.0
      %v556 = vmax.f32 %v524, 0.0
      %v557 = vmax.f32 %v525, 0.0
      %v558 = vmax.f32 %v526, 0.0
      %v559 = vmax.f32 %v527, 0.0
      %v560 = vmax.f32 %v528, 0.0
      %v561 = vmax.f32 %v529, 0.0
      %v562 = vmax.f32 %v530, 0.0
      %v563 = vmax.f32 %v531, 0.0
      %v564 = vmax.f32 %v532, 0.0
      %v565 = vmax.f32 %v533, 0.0
      %v566 = vmax.f32 %v534, 0.0
      %v567 = vmax.f32 %v535, 0.0
      %v568 = vmax.f32 %v536, 0.0
      %v569 = vmax.f32 %v537, 0.0
      %v570 = vmax.f32 %v538, 0.0
      %v571 = vmax.f32 %v539, 0.0
      %v572 = vmax.f32 %v540, 0.0
      %v573 = vmax.f32 %v541, 0.0
      %v574 = vmax.f32 %v542, 0.0
      %v575 = vmax.f32 %v543, 0.0
      %v576 = vmax.f32 %v544, 0.0
      %v577 = vld [vmem:[%s4] sm:$0x77]
      %v578 = vpack.c.bf16 %v547, %v545
      %v579 = vpack.c.bf16 %v548, %v546
      %v580 = vpack.c.bf16 %v551, %v549
      %v581 = vpack.c.bf16 %v552, %v550
      %v582 = vpack.c.bf16 %v555, %v553
      %v583 = vpack.c.bf16 %v556, %v554
      %v584 = vpack.c.bf16 %v559, %v557
      %v585 = vpack.c.bf16 %v560, %v558
      %v586 = vpack.c.bf16 %v563, %v561
      %v587 = vpack.c.bf16 %v564, %v562
      %v588 = vpack.c.bf16 %v567, %v565
      %v589 = vpack.c.bf16 %v568, %v566
      %v590 = vpack.c.bf16 %v571, %v569
      %v591 = vpack.c.bf16 %v572, %v570
      %v592 = vpack.c.bf16 %v575, %v573
      %v593 = vpack.c.bf16 %v576, %v574
      %v594 = vld [vmem:[%s5] sm:$0x3f]
      %596 = vset.pattern.permute.xlu0 0
      %597 = vperm.xlu0 %596, %v594
      %v598 = vpop.permute.xlu0 %597
      %v601 = vunpack.c.l.b16 %v577
      %v602 = vunpack.c.h.b16 %v577
      %v603 = vpack.c.b16 %v601, %v601
      %v604 = vpack.c.b16 %v602, %v602
      %vm606 = vcmask 523264
      %v608 = vsel %vm606, %v604, 0
      %v611 = vsel %vm606, %v579, 0
      %v614 = vsel %vm606, %v581, 0
      %v617 = vsel %vm606, %v583, 0
      %v620 = vsel %vm606, %v585, 0
      %v623 = vsel %vm606, %v587, 0
      %v626 = vsel %vm606, %v589, 0
      %v629 = vsel %vm606, %v591, 0
      %v632 = vsel %vm606, %v593, 0
      %634 = vmatpush.bf16.xpose.msra.mxu0 %v592
      %635 = vmatpush.bf16.xpose.msra.mxu0 %v590
      %636 = vmatpush.bf16.xpose.msra.mxu0 %v588
      %637 = vmatpush.bf16.xpose.msra.mxu0 %v586
      %638 = vmatpush.bf16.xpose.msra.mxu0 %v584
      %639 = vmatpush.bf16.xpose.msra.mxu0 %v582
      %640 = vmatpush.bf16.xpose.msra.mxu0 %v580
      %641 = vmatpush.bf16.xpose.msra.mxu0 %v578
      %642 = vmatmul.bf16.gmra.mxu0 %v603
      %v643 = vpop.f32.mrf.mxu0
      %v644 = vadd.f32 %v598, %v643
      %v645 = vpop.f32.mrf.mxu0
      %646 = vdwg.mxu0
      %647 = vmatpush.bf16.xpose.msra.mxu0 %v632
      %648 = vmatpush.bf16.xpose.msra.mxu0 %v629
      %649 = vmatpush.bf16.xpose.msra.mxu0 %v626
      %650 = vmatpush.bf16.xpose.msra.mxu0 %v623
      %651 = vmatpush.bf16.xpose.msra.mxu0 %v620
      %652 = vmatpush.bf16.xpose.msra.mxu0 %v617
      %653 = vmatpush.bf16.xpose.msra.mxu0 %v614
      %654 = vmatpush.bf16.xpose.msra.mxu0 %v611
      %655 = vmatmul.bf16.gmra.mxu0 %v608
      %v656 = vpop.f32.mrf.mxu0
      %v657 = vadd.f32 %v644, %v656
      %v658 = vpop.f32.mrf.mxu0
      %659 = vdwg.mxu0
      %660 = vst [vmem:[%s251] sm:$0x3f] %v657
      %p661 = scmp.lt.s32.totalorder %s17, 3
      %s662 = scalar_select %p661, %s17, 3
      %s663 = smul.addr %s662, 8
      %s664 = scalar_lea.vmem %s6, %s663
      // Predicated region
      $region45: #{yolox_head_forward.3} parent=43 // pred_check
        %p665 = pneg %p166
      $region46: #{yolox_head_forward.3} parent=43 // pred_check_branch
        %667 = sbr.rel (%p665) target = $region48
      $region47: #{yolox_head_forward.3} parent=43 // pred_region
        _
      $region48: #{yolox_head_forward.3} parent=43 // pred_fallthru
        _
    $region44: #{yolox_head_forward.3} parent=5 // pred_fallthru
      _
    %p668 = scmp.le.s32.totalorder 2, %s12
    // Predicated region
    $region49: #{yolox_head_forward.3} parent=5 // pred_check
      %p669 = pneg %p668
    $region50: #{yolox_head_forward.3} parent=5 // pred_check_branch
      %671 = sbr.rel (%p669) target = $region52
    $region51: #{yolox_head_forward.3} parent=5 // pred_region
      %s672 = ssub.s32 %s12, 2
      // Predicated region
      $region53: #{yolox_head_forward.3} parent=51 // pred_check
        %p673 = pneg %p172
      $region54: #{yolox_head_forward.3} parent=51 // pred_check_branch
        %675 = sbr.rel (%p673) target = $region56
      $region55: #{yolox_head_forward.3} parent=51 // pred_region
        %p676 = scmp.lt.s32.totalorder %s18, 3
        %s677 = scalar_select %p676, %s18, 3
        %s678 = smul.addr %s677, 8
        %s679 = scalar_lea.vmem %s6, %s678
      $region56: #{yolox_head_forward.3} parent=51 // pred_fallthru
        _
    $region52: #{yolox_head_forward.3} parent=5 // pred_fallthru
      _
  $region6: #{yolox_head_forward.3} parent=0 // loop_footer
    %s16 = sadd.s32 1, %s12
  $region7: #{yolox_head_forward.3} parent=0 // loop_footer_branch
    %11 = sbr.rel target = $region3
  $region8: #{yolox_head_forward.3} parent=0 // loop_exit
    _

</llo_original>
